<compile_context>
chip_gen: v5e
topology: v5e:2x2
jax: 0.10.0
libtpu: 0.0.40
codegen_flags: <defaults>
</compile_context>

<pallas_src>
import jax
import jax.numpy as jnp
from jax.experimental import pallas as pl
from jax.experimental.pallas import tpu as pltpu


def _affine_kernel(mu_ref, sc_ref, x_ref, z_ref):
    # mu_ref / sc_ref are either (tm, 1) (per-row params, 4-D path) or
    # (1, tk) (per-column params, 2-D path); jnp broadcasting covers both.
    z_ref[...] = (mu_ref[...] + sc_ref[...] * x_ref[...]).astype(z_ref.dtype)


def _affine_2d_pallas(xf, mu_b, sc_b, param_axis, block_rows, block_cols):
    """Elementwise affine on a 2-D view xf: (M, K).

    param_axis == 0: mu_b/sc_b are (M, 1) (parameter varies along rows).
    param_axis == 1: mu_b/sc_b are (1, K) (parameter varies along lanes).
    """
    M, K = xf.shape
    # Tile sizes: full dim when it fits, else a (8,128)-aligned MiB-scale tile.
    tm = M if M <= block_rows else block_rows   # block_rows is a multiple of 8
    tk = K if K <= block_cols else block_cols   # block_cols is a multiple of 128
    grid = (pl.cdiv(M, tm), pl.cdiv(K, tk))

    if param_axis == 0:
        p_spec = pl.BlockSpec((tm, 1), lambda i, j: (i, 0))
    else:
        p_spec = pl.BlockSpec((1, tk), lambda i, j: (0, j))
    x_spec = pl.BlockSpec((tm, tk), lambda i, j: (i, j))

    return pl.pallas_call(
        _affine_kernel,
        out_shape=jax.ShapeDtypeStruct((M, K), xf.dtype),
        grid=grid,
        in_specs=[p_spec, p_spec, x_spec],
        out_specs=x_spec,
        compiler_params=pltpu.CompilerParams(
            dimension_semantics=("parallel", "parallel")),
    )(mu_b, sc_b, xf)


def affine_transform(x, mu, logsigma, *, block_rows=512, block_cols=1024):
    """Pallas implementation of AffineTransform.forward.

    x: (N, C, H, W) [NCHW, like PyTorch] or (B, C). mu, logsigma: (C,).
    Returns (z, log_abs_det_jacobian) with z matching x's shape/layout.
    """
    # ladj does not depend on x; compute once in the wrapper (no per-step
    # XLU reduce / shared output block in the kernel).
    ladj = jnp.sum(logsigma.astype(jnp.float32))
    scale = jnp.exp(logsigma)  # hoisted: exp on a C-length vector, done once

    if x.ndim == 4:
        N, C, H, W = x.shape
        M, K = N * C, H * W
        xf = x.reshape(M, K)                              # free, row-major
        mu_b = jnp.tile(mu.astype(x.dtype), N).reshape(M, 1)     # row r=n*C+c -> mu[c]
        sc_b = jnp.tile(scale.astype(x.dtype), N).reshape(M, 1)
        zf = _affine_2d_pallas(xf, mu_b, sc_b, 0, block_rows, block_cols)
        return zf.reshape(N, C, H, W), ladj

    if x.ndim == 2:
        B, C = x.shape
        if B * C < (1 << 14):
            # Tiny input: fixed pallas_call overhead dwarfs the work.
            z = mu.reshape(1, C).astype(x.dtype) + scale.reshape(1, C).astype(x.dtype) * x
            return z, ladj
        mu_b = mu.reshape(1, C).astype(x.dtype)
        sc_b = scale.reshape(1, C).astype(x.dtype)
        z = _affine_2d_pallas(x, mu_b, sc_b, 1, block_rows, block_cols)
        return z, ladj

    raise ValueError("AffineTransform only supports 2-D or 4-D inputs")


def _reference(x, mu, logsigma):
    if x.ndim == 4:
        z = mu.reshape(1, -1, 1, 1) + jnp.exp(logsigma).reshape(1, -1, 1, 1) * x
    else:
        z = mu.reshape(1, -1) + jnp.exp(logsigma).reshape(1, -1) * x
    return z, jnp.sum(logsigma)


if __name__ == "__main__":
    key = jax.random.PRNGKey(0)
    k_mu, k_ls, k_x4, k_x2, k_xb, k_mub, k_lsb = jax.random.split(key, 7)

    vec_len = 4  # == channels
    # Module's __init__ makes zero params; use small nonzero values to
    # actually exercise the affine math.
    mu = 0.1 * jax.random.normal(k_mu, (vec_len,), dtype=jnp.float32)
    logsigma = 0.1 * jax.random.normal(k_ls, (vec_len,), dtype=jnp.float32)

    # 4-D NCHW case (Pallas path; single lane-dense (8, 256) block).
    x4 = jax.random.normal(k_x4, (2, 4, 16, 16), dtype=jnp.float32)
    z4, ladj4 = affine_transform(x4, mu, logsigma)
    jax.block_until_ready((z4, ladj4))
    z4_ref, ladj4_ref = _reference(x4, mu, logsigma)
    assert z4.shape == x4.shape
    assert jnp.allclose(z4, z4_ref, atol=1e-5, rtol=1e-5)
    assert jnp.allclose(ladj4, ladj4_ref, atol=1e-6, rtol=1e-6)

    # 4-D case with non-128-divisible spatial size and forced column tiling
    # (exercises pl.cdiv grid + Pallas edge-block clipping; no jnp.pad).
    x4b = jax.random.normal(k_x4, (2, 4, 24, 20), dtype=jnp.float32)  # K = 480
    z4b, ladj4b = affine_transform(x4b, mu, logsigma, block_rows=8, block_cols=128)
    jax.block_until_ready((z4b, ladj4b))
    z4b_ref, ladj4b_ref = _reference(x4b, mu, logsigma)
    assert jnp.allclose(z4b, z4b_ref, atol=1e-5, rtol=1e-5)
    assert jnp.allclose(ladj4b, ladj4b_ref, atol=1e-6, rtol=1e-6)

    # 2-D tiny (B, C) case (bypasses pallas_call by design; pure jnp).
    x2 = jax.random.normal(k_x2, (8, 4), dtype=jnp.float32)
    z2, ladj2 = affine_transform(x2, mu, logsigma)
    jax.block_until_ready((z2, ladj2))
    z2_ref, ladj2_ref = _reference(x2, mu, logsigma)
    assert z2.shape == x2.shape
    assert jnp.allclose(z2, z2_ref, atol=1e-5, rtol=1e-5)
    assert jnp.allclose(ladj2, ladj2_ref, atol=1e-6, rtol=1e-6)

    # 2-D larger (B, C) case (Pallas path with (1, C) resident params).
    mu_b = 0.1 * jax.random.normal(k_mub, (128,), dtype=jnp.float32)
    ls_b = 0.1 * jax.random.normal(k_lsb, (128,), dtype=jnp.float32)
    xb = jax.random.normal(k_xb, (256, 128), dtype=jnp.float32)
    zb, ladjb = affine_transform(xb, mu_b, ls_b)
    jax.block_until_ready((zb, ladjb))
    zb_ref, ladjb_ref = _reference(xb, mu_b, ls_b)
    assert jnp.allclose(zb, zb_ref, atol=1e-5, rtol=1e-5)
    assert jnp.allclose(ladjb, ladjb_ref, atol=1e-5, rtol=1e-5)

    print("KERNEL_OK")
</pallas_src>

<mosaic_0001>
module attributes {stable_mosaic.version = 11 : i64} {
  func.func @_affine_kernel(%arg0: i32, %arg1: i32, %arg2: memref<8x1xf32, #tpu.memory_space<vmem>>, %arg3: memref<8x1xf32, #tpu.memory_space<vmem>>, %arg4: memref<8x256xf32, #tpu.memory_space<vmem>>, %arg5: memref<8x256xf32, #tpu.memory_space<vmem>>) attributes {dimension_semantics = [#tpu.dimension_semantics<parallel>, #tpu.dimension_semantics<parallel>], iteration_bounds = array<i64: 1, 1>, scalar_prefetch = 0 : i64, scratch_operands = 0 : i64, tpu.core_type = #tpu.core_type<tc>, window_params = [{transform_indices = @transform_0, window_bounds = array<i64: 8, 1>}, {transform_indices = @transform_1, window_bounds = array<i64: 8, 1>}, {transform_indices = @transform_2, window_bounds = array<i64: 8, 256>}, {transform_indices = @transform_3, window_bounds = array<i64: 8, 256>}]} {
    %c0 = arith.constant 0 : index
    %c0_0 = arith.constant 0 : index
    %0 = vector.load %arg2[%c0, %c0_0] : memref<8x1xf32, #tpu.memory_space<vmem>>, vector<8x1xf32>
    %c0_1 = arith.constant 0 : index
    %c0_2 = arith.constant 0 : index
    %1 = vector.load %arg3[%c0_1, %c0_2] : memref<8x1xf32, #tpu.memory_space<vmem>>, vector<8x1xf32>
    %c0_3 = arith.constant 0 : index
    %c0_4 = arith.constant 0 : index
    %2 = vector.load %arg4[%c0_3, %c0_4] : memref<8x256xf32, #tpu.memory_space<vmem>>, vector<8x256xf32>
    %3 = vector.broadcast %1 : vector<8x1xf32> to vector<8x256xf32>
    %4 = arith.mulf %3, %2 : vector<8x256xf32>
    %5 = vector.broadcast %0 : vector<8x1xf32> to vector<8x256xf32>
    %6 = arith.addf %5, %4 : vector<8x256xf32>
    %c0_5 = arith.constant 0 : index
    %c0_6 = arith.constant 0 : index
    %7 = vector.load %arg5[%c0_5, %c0_6] : memref<8x256xf32, #tpu.memory_space<vmem>>, vector<8x256xf32>
    tpu.vector_store %arg5[%c0_5, %c0_6], %6 {strides = array<i32>} : memref<8x256xf32, #tpu.memory_space<vmem>>, vector<8x256xf32>,
    return
  }
  func.func @transform_0(%arg0: i32, %arg1: i32) -> (i32, i32) {
    %c0_i32 = arith.constant 0 : i32
    %c0_i32_0 = arith.constant 0 : i32
    return %arg0, %c0_i32 : i32, i32
  }
  func.func @transform_1(%arg0: i32, %arg1: i32) -> (i32, i32) {
    %c0_i32 = arith.constant 0 : i32
    %c0_i32_0 = arith.constant 0 : i32
    return %arg0, %c0_i32 : i32, i32
  }
  func.func @transform_2(%arg0: i32, %arg1: i32) -> (i32, i32) {
    %c0_i32 = arith.constant 0 : i32
    return %arg0, %arg1 : i32, i32
  }
  func.func @transform_3(%arg0: i32, %arg1: i32) -> (i32, i32) {
    %c0_i32 = arith.constant 0 : i32
    return %arg0, %arg1 : i32, i32
  }
}

</mosaic_0001>

<llo_original>
// kernel: tpu_custom_call.1
$region0: #{tpu_custom_call.1}
  #allocation0 [shape = 'u32[]', space=smem, size = 0x4, offset = 0x4, fixed_abs, tag = 'smem constant byte address 0x4 - core index']
  #allocation1 [shape = 'u32[72,128]{1,0:T(1,128)}', space=vmem, size = 0x9000, scoped, tag = 'internal scratch']
  %s0 = inlined_call_operand.vmem [shape: f32[8,1], index: 0, kind: input, shape index: {}]
  %s1 = inlined_call_operand.vmem [shape: f32[8,1], index: 1, kind: input, shape index: {}]
  %s2 = inlined_call_operand.vmem [shape: f32[8,256], index: 2, kind: input, shape index: {}]
  %s3 = inlined_call_operand.hbm [shape: f32[8,256], index: 3, kind: output, shape index: {}]
  %s4 = sld [smem:[#allocation0]]
  $region22: #{tpu_custom_call.1} parent=0
    _
  %s6 = ssub.s32 1, %s4
  %s7 = scalar_select 0, %s6, %s4
  $region1: #{tpu_custom_call.1} parent=0
    #allocation2 [shape = 'u8[8192]{0}', space=vmem, size = 0x2000, scoped, tag = 'output window, operand 0, single buffered']
    #allocation3 [shape = 's32[1]{0}', space=sflag, size = 0x4, scoped, tag = 'scoped memory for tpu_custom_call.1']
    %8 = vsyncpa [#allocation3], 0
    // Predicated region
    $region2: #{tpu_custom_call.1} parent=1 // pred_check
      _
    $region3: #{tpu_custom_call.1} parent=1 // pred_check_branch
      %10 = sbr.rel (0) target = $region5
    $region4: #{tpu_custom_call.1} parent=1 // pred_region
      _
    $region5: #{tpu_custom_call.1} parent=1 // pred_fallthru
      _
    // Predicated region
    $region6: #{tpu_custom_call.1} parent=1 // pred_check
      _
    $region7: #{tpu_custom_call.1} parent=1 // pred_check_branch
      %12 = sbr.rel (0) target = $region9
    $region8: #{tpu_custom_call.1} parent=1 // pred_region
      _
    $region9: #{tpu_custom_call.1} parent=1 // pred_fallthru
      _
    // Predicated region
    $region10: #{tpu_custom_call.1} parent=1 // pred_check
      _
    $region11: #{tpu_custom_call.1} parent=1 // pred_check_branch
      %14 = sbr.rel (0) target = $region13
    $region12: #{tpu_custom_call.1} parent=1 // pred_region
      _
    $region13: #{tpu_custom_call.1} parent=1 // pred_fallthru
      _
    %v15 = vld [vmem:[%s0] sm:$0xff]
    %v16 = vld [vmem:[%s1] sm:$0xff]
    %v17 = vld [vmem:[%s2] sm:$0xff]
    %v18 = vld [vmem:[%s2 + $0x8] sm:$0xff]
    %20 = vset.pattern.permute.xlu0 0
    %21 = vperm.xlu0 %20, %v16
    %v22 = vpop.permute.xlu0 %21
    %v24 = vmul.f32 %v22, %v17
    %v25 = vmul.f32 %v22, %v18
    %27 = vset.pattern.permute.xlu0 0
    %28 = vperm.xlu0 %27, %v15
    %v29 = vpop.permute.xlu0 %28
    %v31 = vadd.f32 %v29, %v24
    %v32 = vadd.f32 %v29, %v25
    %33 = vst [vmem:[#allocation2] sm:$0xff] %v31
    %34 = vst [vmem:[#allocation2 + $0x8] sm:$0xff] %v32
    // Predicated region
    $region14: #{tpu_custom_call.1} parent=1 // pred_check
      _
    $region15: #{tpu_custom_call.1} parent=1 // pred_check_branch
      %36 = sbr.rel (0) target = $region17
    $region16: #{tpu_custom_call.1} parent=1 // pred_region
      %38 = vsyncadd [#allocation3], 0
      %s40 = sshll.u32 [#allocation2], 4
      %s41 = int_to_ptr.vmem [resolvable:$true] %s40
      %s42 = sshll.u32 %s3, 4
      %s43 = int_to_ptr.hbm [resolvable:$true] %s42
      %45 = dma.vmem_to_hbm [thread:$0]  %s41, 256, %s43, [#allocation3]
    $region17: #{tpu_custom_call.1} parent=1 // pred_fallthru
      _
    // Predicated region
    $region18: #{tpu_custom_call.1} parent=1 // pred_check
      _
    $region19: #{tpu_custom_call.1} parent=1 // pred_check_branch
      %47 = sbr.rel (0) target = $region21
    $region20: #{tpu_custom_call.1} parent=1 // pred_region
      %49 = dma.done [#allocation3], 256
    $region21: #{tpu_custom_call.1} parent=1 // pred_fallthru
      _
    %50 = vsyncpa [#allocation3], 1

</llo_original>
